<compile_context>
chip_gen: v7x
topology: tpu7x:2x2x1
jax: 0.10.0
libtpu: 0.0.40
codegen_flags: <defaults>
</compile_context>

<pallas_src>
import jax
import jax.numpy as jnp
from jax.experimental import pallas as pl
from jax.experimental.pallas import tpu as pltpu


def _hardsigmoid_mul_kernel(gate_ref, x_ref, o_ref):
    # gate_ref: (TM, 1)  -- per-channel SE gate (pre-activation)
    # x_ref:    (TM, HW) -- feature-map tile
    # Hardsigmoid (PyTorch): relu6(x + 3) / 6 == clip(x/6 + 1/2, 0, 1).
    # Compute in f32 explicitly (v5e has no bf16 VPU path; avoids weak-type
    # promotion surprises when the feature map is bf16).
    g = gate_ref[...].astype(jnp.float32)
    hs = jnp.clip(g * (1.0 / 6.0) + 0.5, 0.0, 1.0)
    x = x_ref[...].astype(jnp.float32)
    o_ref[...] = (hs * x).astype(o_ref.dtype)


def _pick_row_tile(nc, hw, itemsize):
    """Rows-per-block: ~4 MiB x-block target; with double-buffered input +
    output that's ~16 MiB, under the 32 MiB scoped-VMEM default (v6e/v7x)."""
    if nc <= 8:
        return nc  # full-dim block satisfies the (8,128) rule
    budget_bytes = 4 * 1024 * 1024
    tm = budget_bytes // max(hw * itemsize, 1)
    tm = max(8, min(tm, 1024, nc))
    return (tm // 8) * 8


def hardsigmoid_mul(x85, x81):
    """x85: (N, C, 1, 1) gate, x81: (N, C, H, W) features. Returns (N, C, H, W)."""
    N, C, H, W = x81.shape
    assert x85.shape == (N, C, 1, 1)
    NC, HW = N * C, H * W

    gate2d = x85.reshape(NC, 1)
    x2d = x81.reshape(NC, HW)

    tm = _pick_row_tile(NC, HW, jnp.dtype(x81.dtype).itemsize)
    grid = (pl.cdiv(NC, tm),)

    out2d = pl.pallas_call(
        _hardsigmoid_mul_kernel,
        out_shape=jax.ShapeDtypeStruct((NC, HW), x81.dtype),
        grid=grid,
        in_specs=[
            pl.BlockSpec((tm, 1), lambda i: (i, 0)),    # gate tile
            pl.BlockSpec((tm, HW), lambda i: (i, 0)),   # feature tile
        ],
        out_specs=pl.BlockSpec((tm, HW), lambda i: (i, 0)),
        # Every element of x2d is overwritten exactly once -> safe to alias
        # the feature-map input to the output (no second HBM buffer).
        input_output_aliases={1: 0},
        compiler_params=pltpu.CompilerParams(
            dimension_semantics=("parallel",),  # shard NC tiles across cores (v7x)
        ),
    )(gate2d, x2d)

    return out2d.reshape(N, C, H, W)


if __name__ == "__main__":
    key = jax.random.PRNGKey(0)
    k1, k2, k3, k4 = jax.random.split(key, 4)

    # Shapes implied by the module's forward: x85 = (1,120,1,1), x81 = (1,120,14,14)
    x85 = jax.random.normal(k1, (1, 120, 1, 1), dtype=jnp.float32)
    x81 = jax.random.normal(k2, (1, 120, 14, 14), dtype=jnp.float32)

    out = hardsigmoid_mul(x85, x81)
    jax.block_until_ready(out)

    ref = jnp.clip(x85 / 6.0 + 0.5, 0.0, 1.0) * x81
    assert out.shape == (1, 120, 14, 14)
    assert jnp.allclose(out, ref, atol=1e-6, rtol=1e-6)

    # Second check: larger batch exercises the grid (>1 tile) and the
    # partial-tile path, same semantics.
    g2 = jax.random.normal(k3, (16, 120, 1, 1), dtype=jnp.float32)
    f2 = jax.random.normal(k4, (16, 120, 14, 14), dtype=jnp.float32)
    out2 = hardsigmoid_mul(g2, f2)
    jax.block_until_ready(out2)
    ref2 = jnp.clip(g2 / 6.0 + 0.5, 0.0, 1.0) * f2
    assert jnp.allclose(out2, ref2, atol=1e-6, rtol=1e-6)

    print("KERNEL_OK")
</pallas_src>

<mosaic_0001>
module attributes {stable_mosaic.version = 11 : i64} {
  func.func @_hardsigmoid_mul_kernel(%arg0: i32, %arg1: memref<120x1xf32, #tpu.memory_space<vmem>>, %arg2: memref<120x196xf32, #tpu.memory_space<vmem>>, %arg3: memref<120x196xf32, #tpu.memory_space<vmem>>) attributes {dimension_semantics = [#tpu.dimension_semantics<parallel>], iteration_bounds = array<i64: 1>, scalar_prefetch = 0 : i64, scratch_operands = 0 : i64, tpu.core_type = #tpu.core_type<tc>, window_params = [{transform_indices = @transform_0, window_bounds = array<i64: 120, 1>}, {transform_indices = @transform_1, window_bounds = array<i64: 120, 196>}, {transform_indices = @transform_2, window_bounds = array<i64: 120, 196>}]} {
    %c0 = arith.constant 0 : index
    %c0_0 = arith.constant 0 : index
    %0 = vector.load %arg1[%c0, %c0_0] : memref<120x1xf32, #tpu.memory_space<vmem>>, vector<120x1xf32>
    %cst = arith.constant 0.166666672 : f32
    %1 = vector.broadcast %cst : f32 to vector<120x1xf32>
    %2 = arith.mulf %0, %1 : vector<120x1xf32>
    %cst_1 = arith.constant 5.000000e-01 : f32
    %3 = vector.broadcast %cst_1 : f32 to vector<120x1xf32>
    %4 = arith.addf %2, %3 : vector<120x1xf32>
    %cst_2 = arith.constant 0.000000e+00 : f32
    %cst_3 = arith.constant 1.000000e+00 : f32
    %5 = vector.broadcast %cst_2 : f32 to vector<120x1xf32>
    %6 = arith.maximumf %5, %4 : vector<120x1xf32>
    %7 = vector.broadcast %cst_3 : f32 to vector<120x1xf32>
    %8 = arith.minimumf %7, %6 : vector<120x1xf32>
    %c0_4 = arith.constant 0 : index
    %c0_5 = arith.constant 0 : index
    %9 = vector.load %arg2[%c0_4, %c0_5] : memref<120x196xf32, #tpu.memory_space<vmem>>, vector<120x196xf32>
    %10 = vector.broadcast %8 : vector<120x1xf32> to vector<120x196xf32>
    %11 = arith.mulf %10, %9 : vector<120x196xf32>
    %c0_6 = arith.constant 0 : index
    %c0_7 = arith.constant 0 : index
    %12 = vector.load %arg3[%c0_6, %c0_7] : memref<120x196xf32, #tpu.memory_space<vmem>>, vector<120x196xf32>
    tpu.vector_store %arg3[%c0_6, %c0_7], %11 {strides = array<i32>} : memref<120x196xf32, #tpu.memory_space<vmem>>, vector<120x196xf32>,
    return
  }
  func.func @transform_0(%arg0: i32) -> (i32, i32) {
    %c0_i32 = arith.constant 0 : i32
    %c0_i32_0 = arith.constant 0 : i32
    return %arg0, %c0_i32 : i32, i32
  }
  func.func @transform_1(%arg0: i32) -> (i32, i32) {
    %c0_i32 = arith.constant 0 : i32
    %c0_i32_0 = arith.constant 0 : i32
    return %arg0, %c0_i32 : i32, i32
  }
  func.func @transform_2(%arg0: i32) -> (i32, i32) {
    %c0_i32 = arith.constant 0 : i32
    %c0_i32_0 = arith.constant 0 : i32
    return %arg0, %c0_i32 : i32, i32
  }
}

</mosaic_0001>

<llo_original>
// kernel: tpu_custom_call.1
$region0: #{tpu_custom_call.1}
  #allocation0 [shape = 'u32[]', space=smem, size = 0x4, offset = 0x4, fixed_abs, tag = 'smem constant byte address 0x4 - core index']
  #allocation1 [shape = 'u32[144,128]{1,0:T(1,128)}', space=vmem, size = 0x12000, scoped, tag = 'internal scratch']
  %s0 = inlined_call_operand.vmem [shape: f32[120,1], index: 0, kind: input, shape index: {}]
  %s1 = inlined_call_operand.vmem [shape: f32[120,196], index: 1, kind: input, shape index: {}, may-alias: {1,2}]
  %s2 = inlined_call_operand.vmem [shape: f32[120,196], index: 2, kind: output, shape index: {}, may-alias: {1,2}]
  %s3 = sld [smem:[#allocation0]]
  $region18: #{tpu_custom_call.1} parent=0
    _
  %s5 = ssub.s32 1, %s3
  %s6 = scalar_select 0, %s5, %s3
  // Predicated region
  $region2: #{tpu_custom_call.1} parent=0 // pred_check
    _
  $region3: #{tpu_custom_call.1} parent=0 // pred_check_branch
    %8 = sbr.rel (0) target = $region5
  $region4: #{tpu_custom_call.1} parent=0 // pred_region
    _
  $region5: #{tpu_custom_call.1} parent=0 // pred_fallthru
    _
  // Predicated region
  $region6: #{tpu_custom_call.1} parent=0 // pred_check
    _
  $region7: #{tpu_custom_call.1} parent=0 // pred_check_branch
    %10 = sbr.rel (0) target = $region9
  $region8: #{tpu_custom_call.1} parent=0 // pred_region
    _
  $region9: #{tpu_custom_call.1} parent=0 // pred_fallthru
    _
  %v11 = vld [vmem:[%s0] sm:$0xff]
  %v12 = vld [vmem:[%s0 + $0x8] sm:$0xff]
  %v13 = vld [vmem:[%s0 + $0x10] sm:$0xff]
  %v14 = vld [vmem:[%s0 + $0x18] sm:$0xff]
  %v15 = vld [vmem:[%s0 + $0x20] sm:$0xff]
  %v16 = vld [vmem:[%s0 + $0x28] sm:$0xff]
  %v17 = vld [vmem:[%s0 + $0x30] sm:$0xff]
  %v18 = vld [vmem:[%s0 + $0x38] sm:$0xff]
  %v19 = vld [vmem:[%s0 + $0x40] sm:$0xff]
  %v20 = vld [vmem:[%s0 + $0x48] sm:$0xff]
  %v21 = vld [vmem:[%s0 + $0x50] sm:$0xff]
  %v22 = vld [vmem:[%s0 + $0x58] sm:$0xff]
  %v23 = vld [vmem:[%s0 + $0x60] sm:$0xff]
  %v24 = vld [vmem:[%s0 + $0x68] sm:$0xff]
  %v25 = vld [vmem:[%s0 + $0x70] sm:$0xff]
  %v26 = vmul.f32 %v11, 0.16666667
  %v27 = vmul.f32 %v12, 0.16666667
  %v28 = vmul.f32 %v13, 0.16666667
  %v29 = vmul.f32 %v14, 0.16666667
  %v30 = vmul.f32 %v15, 0.16666667
  %v31 = vmul.f32 %v16, 0.16666667
  %v32 = vmul.f32 %v17, 0.16666667
  %v33 = vmul.f32 %v18, 0.16666667
  %v34 = vmul.f32 %v19, 0.16666667
  %v35 = vmul.f32 %v20, 0.16666667
  %v36 = vmul.f32 %v21, 0.16666667
  %v37 = vmul.f32 %v22, 0.16666667
  %v38 = vmul.f32 %v23, 0.16666667
  %v39 = vmul.f32 %v24, 0.16666667
  %v40 = vmul.f32 %v25, 0.16666667
  %v41 = vadd.f32 %v26, 0.5
  %v42 = vadd.f32 %v27, 0.5
  %v43 = vadd.f32 %v28, 0.5
  %v44 = vadd.f32 %v29, 0.5
  %v45 = vadd.f32 %v30, 0.5
  %v46 = vadd.f32 %v31, 0.5
  %v47 = vadd.f32 %v32, 0.5
  %v48 = vadd.f32 %v33, 0.5
  %v49 = vadd.f32 %v34, 0.5
  %v50 = vadd.f32 %v35, 0.5
  %v51 = vadd.f32 %v36, 0.5
  %v52 = vadd.f32 %v37, 0.5
  %v53 = vadd.f32 %v38, 0.5
  %v54 = vadd.f32 %v39, 0.5
  %v55 = vadd.f32 %v40, 0.5
  %v56 = vmax.f32 %v41, 0.0
  %v57 = vmax.f32 %v42, 0.0
  %v58 = vmax.f32 %v43, 0.0
  %v59 = vmax.f32 %v44, 0.0
  %v60 = vmax.f32 %v45, 0.0
  %v61 = vmax.f32 %v46, 0.0
  %v62 = vmax.f32 %v47, 0.0
  %v63 = vmax.f32 %v48, 0.0
  %v64 = vmax.f32 %v49, 0.0
  %v65 = vmax.f32 %v50, 0.0
  %v66 = vmax.f32 %v51, 0.0
  %v67 = vmax.f32 %v52, 0.0
  %v68 = vmax.f32 %v53, 0.0
  %v69 = vmax.f32 %v54, 0.0
  %v70 = vmax.f32 %v55, 0.0
  %v71 = vmin.f32 %v56, 1.0
  %v72 = vmin.f32 %v57, 1.0
  %v73 = vmin.f32 %v58, 1.0
  %v74 = vmin.f32 %v59, 1.0
  %v75 = vmin.f32 %v60, 1.0
  %v76 = vmin.f32 %v61, 1.0
  %v77 = vmin.f32 %v62, 1.0
  %v78 = vmin.f32 %v63, 1.0
  %v79 = vmin.f32 %v64, 1.0
  %v80 = vmin.f32 %v65, 1.0
  %v81 = vmin.f32 %v66, 1.0
  %v82 = vmin.f32 %v67, 1.0
  %v83 = vmin.f32 %v68, 1.0
  %v84 = vmin.f32 %v69, 1.0
  %v85 = vmin.f32 %v70, 1.0
  %v86 = vld [vmem:[%s1] sm:$0xff]
  %v87 = vld [vmem:[%s1 + $0x8] sm:$0xff]
  %v88 = vld [vmem:[%s1 + $0x10] sm:$0xff]
  %v89 = vld [vmem:[%s1 + $0x18] sm:$0xff]
  %v90 = vld [vmem:[%s1 + $0x20] sm:$0xff]
  %v91 = vld [vmem:[%s1 + $0x28] sm:$0xff]
  %v92 = vld [vmem:[%s1 + $0x30] sm:$0xff]
  %v93 = vld [vmem:[%s1 + $0x38] sm:$0xff]
  %v94 = vld [vmem:[%s1 + $0x40] sm:$0xff]
  %v95 = vld [vmem:[%s1 + $0x48] sm:$0xff]
  %v96 = vld [vmem:[%s1 + $0x50] sm:$0xff]
  %v97 = vld [vmem:[%s1 + $0x58] sm:$0xff]
  %v98 = vld [vmem:[%s1 + $0x60] sm:$0xff]
  %v99 = vld [vmem:[%s1 + $0x68] sm:$0xff]
  %v100 = vld [vmem:[%s1 + $0x70] sm:$0xff]
  %v101 = vld [vmem:[%s1 + $0x78] sm:$0xff]
  %v102 = vld [vmem:[%s1 + $0x80] sm:$0xff]
  %v103 = vld [vmem:[%s1 + $0x88] sm:$0xff]
  %v104 = vld [vmem:[%s1 + $0x90] sm:$0xff]
  %v105 = vld [vmem:[%s1 + $0x98] sm:$0xff]
  %v106 = vld [vmem:[%s1 + $0xa0] sm:$0xff]
  %v107 = vld [vmem:[%s1 + $0xa8] sm:$0xff]
  %v108 = vld [vmem:[%s1 + $0xb0] sm:$0xff]
  %v109 = vld [vmem:[%s1 + $0xb8] sm:$0xff]
  %v110 = vld [vmem:[%s1 + $0xc0] sm:$0xff]
  %v111 = vld [vmem:[%s1 + $0xc8] sm:$0xff]
  %v112 = vld [vmem:[%s1 + $0xd0] sm:$0xff]
  %v113 = vld [vmem:[%s1 + $0xd8] sm:$0xff]
  %v114 = vld [vmem:[%s1 + $0xe0] sm:$0xff]
  %v115 = vld [vmem:[%s1 + $0xe8] sm:$0xff]
  %117 = vset.pattern.permute.xlu0 0
  %118 = vperm.xlu0 %117, %v71
  %v119 = vpop.permute.xlu0 %118
  %122 = vset.pattern.permute.xlu0 0
  %123 = vperm.xlu0 %122, %v72
  %v124 = vpop.permute.xlu0 %123
  %127 = vset.pattern.permute.xlu0 0
  %128 = vperm.xlu0 %127, %v73
  %v129 = vpop.permute.xlu0 %128
  %132 = vset.pattern.permute.xlu0 0
  %133 = vperm.xlu0 %132, %v74
  %v134 = vpop.permute.xlu0 %133
  %137 = vset.pattern.permute.xlu0 0
  %138 = vperm.xlu0 %137, %v75
  %v139 = vpop.permute.xlu0 %138
  %142 = vset.pattern.permute.xlu0 0
  %143 = vperm.xlu0 %142, %v76
  %v144 = vpop.permute.xlu0 %143
  %147 = vset.pattern.permute.xlu0 0
  %148 = vperm.xlu0 %147, %v77
  %v149 = vpop.permute.xlu0 %148
  %152 = vset.pattern.permute.xlu0 0
  %153 = vperm.xlu0 %152, %v78
  %v154 = vpop.permute.xlu0 %153
  %157 = vset.pattern.permute.xlu0 0
  %158 = vperm.xlu0 %157, %v79
  %v159 = vpop.permute.xlu0 %158
  %162 = vset.pattern.permute.xlu0 0
  %163 = vperm.xlu0 %162, %v80
  %v164 = vpop.permute.xlu0 %163
  %167 = vset.pattern.permute.xlu0 0
  %168 = vperm.xlu0 %167, %v81
  %v169 = vpop.permute.xlu0 %168
  %172 = vset.pattern.permute.xlu0 0
  %173 = vperm.xlu0 %172, %v82
  %v174 = vpop.permute.xlu0 %173
  %177 = vset.pattern.permute.xlu0 0
  %178 = vperm.xlu0 %177, %v83
  %v179 = vpop.permute.xlu0 %178
  %182 = vset.pattern.permute.xlu0 0
  %183 = vperm.xlu0 %182, %v84
  %v184 = vpop.permute.xlu0 %183
  %187 = vset.pattern.permute.xlu0 0
  %188 = vperm.xlu0 %187, %v85
  %v189 = vpop.permute.xlu0 %188
  %v191 = vmul.f32 %v119, %v86
  %v192 = vmul.f32 %v119, %v87
  %v193 = vmul.f32 %v124, %v88
  %v194 = vmul.f32 %v124, %v89
  %v195 = vmul.f32 %v129, %v90
  %v196 = vmul.f32 %v129, %v91
  %v197 = vmul.f32 %v134, %v92
  %v198 = vmul.f32 %v134, %v93
  %v199 = vmul.f32 %v139, %v94
  %v200 = vmul.f32 %v139, %v95
  %v201 = vmul.f32 %v144, %v96
  %v202 = vmul.f32 %v144, %v97
  %v203 = vmul.f32 %v149, %v98
  %v204 = vmul.f32 %v149, %v99
  %v205 = vmul.f32 %v154, %v100
  %v206 = vmul.f32 %v154, %v101
  %v207 = vmul.f32 %v159, %v102
  %v208 = vmul.f32 %v159, %v103
  %v209 = vmul.f32 %v164, %v104
  %v210 = vmul.f32 %v164, %v105
  %v211 = vmul.f32 %v169, %v106
  %v212 = vmul.f32 %v169, %v107
  %v213 = vmul.f32 %v174, %v108
  %v214 = vmul.f32 %v174, %v109
  %v215 = vmul.f32 %v179, %v110
  %v216 = vmul.f32 %v179, %v111
  %v217 = vmul.f32 %v184, %v112
  %v218 = vmul.f32 %v184, %v113
  %v219 = vmul.f32 %v189, %v114
  %v220 = vmul.f32 %v189, %v115
  %221 = vst [vmem:[%s2] sm:$0xff] %v191
  %vm222 = vcmask 556032
  %223 = vst.msk [vmem:[%s2 + $0x8] sm:$0xff] %vm222, %v192
  %224 = vst [vmem:[%s2 + $0x10] sm:$0xff] %v193
  %225 = vst.msk [vmem:[%s2 + $0x18] sm:$0xff] %vm222, %v194
  %226 = vst [vmem:[%s2 + $0x20] sm:$0xff] %v195
  %227 = vst.msk [vmem:[%s2 + $0x28] sm:$0xff] %vm222, %v196
  %228 = vst [vmem:[%s2 + $0x30] sm:$0xff] %v197
  %229 = vst.msk [vmem:[%s2 + $0x38] sm:$0xff] %vm222, %v198
  %230 = vst [vmem:[%s2 + $0x40] sm:$0xff] %v199
  %231 = vst.msk [vmem:[%s2 + $0x48] sm:$0xff] %vm222, %v200
  %232 = vst [vmem:[%s2 + $0x50] sm:$0xff] %v201
  %233 = vst.msk [vmem:[%s2 + $0x58] sm:$0xff] %vm222, %v202
  %234 = vst [vmem:[%s2 + $0x60] sm:$0xff] %v203
  %235 = vst.msk [vmem:[%s2 + $0x68] sm:$0xff] %vm222, %v204
  %236 = vst [vmem:[%s2 + $0x70] sm:$0xff] %v205
  %237 = vst.msk [vmem:[%s2 + $0x78] sm:$0xff] %vm222, %v206
  %238 = vst [vmem:[%s2 + $0x80] sm:$0xff] %v207
  %239 = vst.msk [vmem:[%s2 + $0x88] sm:$0xff] %vm222, %v208
  %240 = vst [vmem:[%s2 + $0x90] sm:$0xff] %v209
  %241 = vst.msk [vmem:[%s2 + $0x98] sm:$0xff] %vm222, %v210
  %242 = vst [vmem:[%s2 + $0xa0] sm:$0xff] %v211
  %243 = vst.msk [vmem:[%s2 + $0xa8] sm:$0xff] %vm222, %v212
  %244 = vst [vmem:[%s2 + $0xb0] sm:$0xff] %v213
  %245 = vst.msk [vmem:[%s2 + $0xb8] sm:$0xff] %vm222, %v214
  %246 = vst [vmem:[%s2 + $0xc0] sm:$0xff] %v215
  %247 = vst.msk [vmem:[%s2 + $0xc8] sm:$0xff] %vm222, %v216
  %248 = vst [vmem:[%s2 + $0xd0] sm:$0xff] %v217
  %249 = vst.msk [vmem:[%s2 + $0xd8] sm:$0xff] %vm222, %v218
  %250 = vst [vmem:[%s2 + $0xe0] sm:$0xff] %v219
  %251 = vst.msk [vmem:[%s2 + $0xe8] sm:$0xff] %vm222, %v220
  // Predicated region
  $region10: #{tpu_custom_call.1} parent=0 // pred_check
    _
  $region11: #{tpu_custom_call.1} parent=0 // pred_check_branch
    %253 = sbr.rel (0) target = $region13
  $region12: #{tpu_custom_call.1} parent=0 // pred_region
    _
  $region13: #{tpu_custom_call.1} parent=0 // pred_fallthru
    _
  // Predicated region
  $region14: #{tpu_custom_call.1} parent=0 // pred_check
    _
  $region15: #{tpu_custom_call.1} parent=0 // pred_check_branch
    %255 = sbr.rel (0) target = $region17
  $region16: #{tpu_custom_call.1} parent=0 // pred_region
    _
  $region17: #{tpu_custom_call.1} parent=0 // pred_fallthru
    _

</llo_original>
